<compile_context>
chip_gen: v5e
topology: v5e:2x2
jax: 0.10.0
libtpu: 0.0.40
codegen_flags: <defaults>
</compile_context>

<pallas_src>
import jax
import jax.numpy as jnp
from jax.experimental import pallas as pl
from jax.experimental.pallas import tpu as pltpu


def _sigmoid(x):
    # Single EUP op (tanh) per gate; exact sigmoid identity.
    return 0.5 * (jnp.tanh(0.5 * x) + 1.0)


def vqa_kernel(video_ref,    # (T, NB, D)   TIME-MAJOR video features (one batch tile)
               text_ref,     # (NB, 768)    frozen text-encoder embeddings
               wih_ref,      # (D, 4H)      LSTM input->gates weight (pre-transposed)
               whh_ref,      # (H, 4H)      LSTM hidden->gates weight (pre-transposed)
               bl_ref,       # (1, 4H)      LSTM bias (b_ih + b_hh)
               wv_ref,       # (1, H)       folded head weight, video part (row)
               wtext_ref,    # (1, 768)     folded head weight, text part (row, f32)
               bh_ref,       # (1, 1)       folded head bias (scalar)
               out_ref):     # (NB, 1)      per-(sample, choice) logit
    T, NB, D = video_ref.shape
    H = whh_ref.shape[0]

    # ---- video branch: single-layer LSTM, final hidden state --------------
    # Hoisted input projection: ONE (T*NB, D) @ (D, 4H) MXU matmul (f32 acc).
    vid2d = video_ref[...].reshape(T * NB, D)
    gx = jnp.dot(vid2d, wih_ref[...],
                 preferred_element_type=jnp.float32) + bl_ref[...]
    gx = gx.reshape(T, NB, 4 * H)        # leading-dim split: free

    whh = whh_ref[...]
    h = jnp.zeros((NB, H), jnp.float32)
    c = jnp.zeros((NB, H), jnp.float32)
    # Fully unrolled recurrence (T static, small).  gx[t] is a free leading-dim
    # slice (time-major layout); only h @ W_hh runs per step on the MXU.
    for t in range(T):
        g = gx[t] + jnp.dot(h, whh, preferred_element_type=jnp.float32)
        # PyTorch gate order: i, f, g, o
        i_g = _sigmoid(g[:, 0 * H:1 * H])
        f_g = _sigmoid(g[:, 1 * H:2 * H])
        g_g = jnp.tanh(g[:, 2 * H:3 * H])
        o_g = _sigmoid(g[:, 3 * H:4 * H])
        c = f_g * c + i_g * g_g
        h = o_g * jnp.tanh(c)

    # ---- folded head (text_fc + concat + fc1 + fc2 -> two row-dots + bias) --
    t32 = text_ref[...].astype(jnp.float32)
    logit = (jnp.sum(h * wv_ref[...], axis=-1, keepdims=True)
             + jnp.sum(t32 * wtext_ref[...], axis=-1, keepdims=True)
             + bh_ref[...])
    out_ref[...] = logit.astype(out_ref.dtype)


def video_qa_forward(video_feats, text_embeds_768, params, *,
                     block_n=None, compute_dtype=jnp.bfloat16):
    """video_feats: (N, T, D) batch-first (as in PyTorch); returns (N//4, 4) logits.

    block_n: batch-tile size (must divide N; multiple of 8 when the grid has
             more than one step).  Per-tile VMEM footprint is roughly
             2*(block_n*T*128*itemsize  [video, lane-padded to 128]
                + block_n*768*itemsize  [text])
             + block_n*T*4H*4           [gx, f32]  + small weights,
             so even block_n=1024 stays well under the 48 MiB cap below.
    compute_dtype: dtype for the STREAMED operands (video, text, W_ih).
             bf16 halves HBM traffic and hits MXU peak on v6e/v7x; recurrence,
             accumulation, LSTM state and the folded head stay f32 (v5e-safe).
    """
    N, T, D = video_feats.shape
    H = params["whh"].shape[0]

    assert N % 4 == 0, "rows must come in groups of 4 answer choices"

    if block_n is None:
        # Largest tile <=1024 rows that divides N and gives >=2 grid steps
        # (pipelined DMA overlap; both TensorCores on v7x); else one full tile.
        block_n = N
        for cand in (1024, 512, 256, 128, 64, 32, 16, 8):
            if N % cand == 0 and N // cand >= 2:
                block_n = cand
                break
    assert N % block_n == 0, "block_n must divide N"
    if block_n != N:
        assert block_n % 8 == 0, "multi-step grid needs sublane-aligned tiles"

    f32 = jnp.float32
    # ---- offline folds (tiny, f32) -----------------------------------------
    w1 = params["w1"].astype(f32)
    w2 = params["w2"].astype(f32)
    w12 = w1 @ w2                                          # (H+TH, 1)
    wv_row = jnp.asarray(w12[:H, :].T, f32)                # (1, H)   video part
    wtx_col = jnp.asarray(w12[H:, :], f32)                 # (TH, 1)  text part
    # Text branch is fully linear: fold text_fc through the head.
    w_text_row = jnp.asarray((params["wt"].astype(f32) @ wtx_col).T, f32)   # (1, 768)
    b_head = jnp.asarray(params["bt"].astype(f32) @ wtx_col
                         + params["b1"].astype(f32) @ w2
                         + params["b2"].astype(f32), f32)                    # (1, 1)

    cd = compute_dtype
    # Time-major video (one XLA transpose outside the serial recurrence).
    video_tm = jnp.transpose(video_feats, (1, 0, 2)).astype(cd)   # (T, N, D)
    text_c = text_embeds_768.astype(cd)
    wih_c = params["wih"].astype(cd)

    # Small f32 operands used inside the recurrence / head.
    whh = jnp.asarray(params["whh"], f32)
    bl = jnp.asarray(params["bl"], f32)

    def _const_spec(x):
        # Whole array, same block every grid step -> stays VMEM-resident.
        return pl.BlockSpec(x.shape, lambda i, nd=x.ndim: (0,) * nd)

    grid = (N // block_n,)
    in_specs = [
        pl.BlockSpec((T, block_n, D), lambda i: (0, i, 0)),   # time-major video tile
        pl.BlockSpec((block_n, 768), lambda i: (i, 0)),       # text tile
        _const_spec(wih_c), _const_spec(whh), _const_spec(bl),
        _const_spec(wv_row), _const_spec(w_text_row), _const_spec(b_head),
    ]
    out_specs = pl.BlockSpec((block_n, 1), lambda i: (i, 0))

    out = pl.pallas_call(
        vqa_kernel,
        out_shape=jax.ShapeDtypeStruct((N, 1), jnp.float32),
        grid_spec=pltpu.PrefetchScalarGridSpec(
            num_scalar_prefetch=0,
            grid=grid,
            in_specs=in_specs,
            out_specs=out_specs,
        ),
        compiler_params=pltpu.CompilerParams(
            # Batch tiles are independent -> shard across TCs on v7x.
            dimension_semantics=("parallel",),
            # Above v5e/v6e scoped defaults (16/32 MiB), below v7x physical 64 MiB.
            vmem_limit_bytes=48 * 1024 * 1024,
        ),
    )(video_tm, text_c, wih_c, whh, bl, wv_row, w_text_row, b_head)
    return out.reshape(-1, 4)


def make_params(key, input_dim, hidden_dim, text_hidden_dim, hidden_dim1):
    """Deterministic synthetic parameters (shapes match the nn.Module __init__)."""
    ks = jax.random.split(key, 10)
    f32 = jnp.float32
    s = 0.1
    return {
        # text_fc: Linear(768 -> text_hidden_dim), stored pre-transposed
        "wt": (s * jax.random.normal(ks[0], (768, text_hidden_dim))).astype(f32),
        "bt": (s * jax.random.normal(ks[1], (1, text_hidden_dim))).astype(f32),
        # LSTM(input_dim -> hidden_dim): weight_ih (4H,D)^T, weight_hh (4H,H)^T, b_ih+b_hh
        "wih": (s * jax.random.normal(ks[2], (input_dim, 4 * hidden_dim))).astype(f32),
        "whh": (s * jax.random.normal(ks[3], (hidden_dim, 4 * hidden_dim))).astype(f32),
        "bl": (s * jax.random.normal(ks[4], (1, 4 * hidden_dim))).astype(f32),
        # fc_fusion1: Linear(H+TH -> hidden_dim1)
        "w1": (s * jax.random.normal(ks[5], (hidden_dim + text_hidden_dim, hidden_dim1))).astype(f32),
        "b1": (s * jax.random.normal(ks[6], (1, hidden_dim1))).astype(f32),
        # fc_fusion2: Linear(hidden_dim1 -> 1)
        "w2": (s * jax.random.normal(ks[7], (hidden_dim1, 1))).astype(f32),
        "b2": (s * jax.random.normal(ks[8], (1, 1))).astype(f32),
    }


def reference_forward(video_feats, text_embeds_768, params):
    """Pure-JAX reference (mirrors the PyTorch semantics) for validation."""
    t_emb = text_embeds_768 @ params["wt"] + params["bt"]
    N, T, D = video_feats.shape
    H = params["whh"].shape[0]
    h = jnp.zeros((N, H), jnp.float32)
    c = jnp.zeros((N, H), jnp.float32)
    for t in range(T):
        g = video_feats[:, t, :] @ params["wih"] + h @ params["whh"] + params["bl"]
        i_g = jax.nn.sigmoid(g[:, 0 * H:1 * H])
        f_g = jax.nn.sigmoid(g[:, 1 * H:2 * H])
        g_g = jnp.tanh(g[:, 2 * H:3 * H])
        o_g = jax.nn.sigmoid(g[:, 3 * H:4 * H])
        c = f_g * c + i_g * g_g
        h = o_g * jnp.tanh(c)
    combined = jnp.concatenate([h, t_emb], axis=1)
    logits = (combined @ params["w1"] + params["b1"]) @ params["w2"] + params["b2"]
    return logits.reshape(-1, 4)


if __name__ == "__main__":
    # Small shapes: batch=2, num_choices=4 -> N=8 rows; T=8 frames;
    # input_dim=32, hidden_dim=32, text_hidden_dim=32, hidden_dim1=32.
    batch, num_choices = 2, 4
    N = batch * num_choices
    T, D, H, TH, H1 = 8, 32, 32, 32, 32

    key = jax.random.PRNGKey(0)
    k_v, k_t, k_p = jax.random.split(key, 3)

    video_feats = jax.random.normal(k_v, (N, T, D), dtype=jnp.float32)
    text_embeds_768 = jax.random.normal(k_t, (N, 768), dtype=jnp.float32)
    params = make_params(k_p, D, H, TH, H1)

    ref = reference_forward(video_feats, text_embeds_768, params)

    # f32 compute path: tight check against the pure-JAX reference.
    fwd_f32 = jax.jit(lambda v, t: video_qa_forward(v, t, params,
                                                    compute_dtype=jnp.float32))
    logits = jax.block_until_ready(fwd_f32(video_feats, text_embeds_768))
    assert logits.shape == (batch, num_choices)
    assert jnp.allclose(logits, ref, atol=2e-2, rtol=2e-2), (logits, ref)

    # Default bf16-streaming path (v6e/v7x): looser tolerance.
    fwd_bf16 = jax.jit(lambda v, t: video_qa_forward(v, t, params))
    logits_bf16 = jax.block_until_ready(fwd_bf16(video_feats, text_embeds_768))
    assert logits_bf16.shape == (batch, num_choices)
    assert jnp.allclose(logits_bf16, ref, atol=5e-2), (logits_bf16, ref)

    print("KERNEL_OK")
</pallas_src>

<mosaic_0001>
module attributes {stable_mosaic.version = 11 : i64} {
  func.func @vqa_kernel(%arg0: i32, %arg1: memref<8x8x32xf32, #tpu.memory_space<vmem>>, %arg2: memref<8x768xf32, #tpu.memory_space<vmem>>, %arg3: memref<32x128xf32, #tpu.memory_space<vmem>>, %arg4: memref<32x128xf32, #tpu.memory_space<vmem>>, %arg5: memref<1x128xf32, #tpu.memory_space<vmem>>, %arg6: memref<1x32xf32, #tpu.memory_space<vmem>>, %arg7: memref<1x768xf32, #tpu.memory_space<vmem>>, %arg8: memref<1x1xf32, #tpu.memory_space<vmem>>, %arg9: memref<8x1xf32, #tpu.memory_space<vmem>>) attributes {dimension_semantics = [#tpu.dimension_semantics<parallel>], iteration_bounds = array<i64: 1>, scalar_prefetch = 0 : i64, scratch_operands = 0 : i64, tpu.core_type = #tpu.core_type<tc>, window_params = [{transform_indices = @transform_0, window_bounds = array<i64: 8, 8, 32>}, {transform_indices = @transform_1, window_bounds = array<i64: 8, 768>}, {pipeline_mode = #tpu.pipeline_mode<synchronous>, transform_indices = @transform_2, window_bounds = array<i64: 32, 128>}, {pipeline_mode = #tpu.pipeline_mode<synchronous>, transform_indices = @transform_3, window_bounds = array<i64: 32, 128>}, {pipeline_mode = #tpu.pipeline_mode<synchronous>, transform_indices = @transform_4, window_bounds = array<i64: 1, 128>}, {pipeline_mode = #tpu.pipeline_mode<synchronous>, transform_indices = @transform_5, window_bounds = array<i64: 1, 32>}, {pipeline_mode = #tpu.pipeline_mode<synchronous>, transform_indices = @transform_6, window_bounds = array<i64: 1, 768>}, {pipeline_mode = #tpu.pipeline_mode<synchronous>, transform_indices = @transform_7, window_bounds = array<i64: 1, 1>}, {transform_indices = @transform_8, window_bounds = array<i64: 8, 1>}]} {
    %c0 = arith.constant 0 : index
    %c0_0 = arith.constant 0 : index
    %c0_1 = arith.constant 0 : index
    %0 = vector.load %arg1[%c0, %c0_0, %c0_1] : memref<8x8x32xf32, #tpu.memory_space<vmem>>, vector<8x8x32xf32>
    %1 = vector.shape_cast %0 : vector<8x8x32xf32> to vector<64x32xf32>
    %c0_2 = arith.constant 0 : index
    %c0_3 = arith.constant 0 : index
    %2 = vector.load %arg3[%c0_2, %c0_3] : memref<32x128xf32, #tpu.memory_space<vmem>>, vector<32x128xf32>
    %cst = arith.constant dense<0.000000e+00> : vector<64x128xf32>
    %3 = tpu.matmul %1, %2, %cst {dimension_numbers = #tpu.dot_dimension_numbers<[1], [0], [0], [1], [0, 0, 1, 1], [], []>} : vector<64x32xf32>, vector<32x128xf32>, vector<64x128xf32> -> vector<64x128xf32>
    %c0_4 = arith.constant 0 : index
    %c0_5 = arith.constant 0 : index
    %4 = vector.load %arg5[%c0_4, %c0_5] : memref<1x128xf32, #tpu.memory_space<vmem>>, vector<1x128xf32>
    %5 = vector.broadcast %4 : vector<1x128xf32> to vector<64x128xf32>
    %6 = arith.addf %3, %5 : vector<64x128xf32>
    %7 = vector.shape_cast %6 : vector<64x128xf32> to vector<8x8x128xf32>
    %c0_6 = arith.constant 0 : index
    %c0_7 = arith.constant 0 : index
    %8 = vector.load %arg4[%c0_6, %c0_7] : memref<32x128xf32, #tpu.memory_space<vmem>>, vector<32x128xf32>
    %cst_8 = arith.constant 0.000000e+00 : f32
    %9 = vector.broadcast %cst_8 : f32 to vector<8x32xf32>
    %cst_9 = arith.constant 0.000000e+00 : f32
    %10 = vector.broadcast %cst_9 : f32 to vector<8x32xf32>
    %11 = vector.extract_strided_slice %7 {offsets = [0, 0, 0], sizes = [1, 8, 128], strides = [1, 1, 1]} : vector<8x8x128xf32> to vector<1x8x128xf32>
    %12 = vector.shape_cast %11 : vector<1x8x128xf32> to vector<8x128xf32>
    %cst_10 = arith.constant dense<0.000000e+00> : vector<8x128xf32>
    %13 = tpu.matmul %9, %8, %cst_10 {dimension_numbers = #tpu.dot_dimension_numbers<[1], [0], [0], [1], [0, 0, 1, 1], [], []>} : vector<8x32xf32>, vector<32x128xf32>, vector<8x128xf32> -> vector<8x128xf32>
    %14 = arith.addf %12, %13 : vector<8x128xf32>
    %15 = vector.extract_strided_slice %14 {offsets = [0, 0], sizes = [8, 32], strides = [1, 1]} : vector<8x128xf32> to vector<8x32xf32>
    %cst_11 = arith.constant 5.000000e-01 : f32
    %16 = vector.broadcast %cst_11 : f32 to vector<8x32xf32>
    %17 = arith.mulf %16, %15 : vector<8x32xf32>
    %18 = math.tanh %17 : vector<8x32xf32>
    %cst_12 = arith.constant 1.000000e+00 : f32
    %19 = vector.broadcast %cst_12 : f32 to vector<8x32xf32>
    %20 = arith.addf %18, %19 : vector<8x32xf32>
    %cst_13 = arith.constant 5.000000e-01 : f32
    %21 = vector.broadcast %cst_13 : f32 to vector<8x32xf32>
    %22 = arith.mulf %21, %20 : vector<8x32xf32>
    %23 = vector.extract_strided_slice %14 {offsets = [0, 32], sizes = [8, 32], strides = [1, 1]} : vector<8x128xf32> to vector<8x32xf32>
    %cst_14 = arith.constant 5.000000e-01 : f32
    %24 = vector.broadcast %cst_14 : f32 to vector<8x32xf32>
    %25 = arith.mulf %24, %23 : vector<8x32xf32>
    %26 = math.tanh %25 : vector<8x32xf32>
    %cst_15 = arith.constant 1.000000e+00 : f32
    %27 = vector.broadcast %cst_15 : f32 to vector<8x32xf32>
    %28 = arith.addf %26, %27 : vector<8x32xf32>
    %cst_16 = arith.constant 5.000000e-01 : f32
    %29 = vector.broadcast %cst_16 : f32 to vector<8x32xf32>
    %30 = arith.mulf %29, %28 : vector<8x32xf32>
    %31 = vector.extract_strided_slice %14 {offsets = [0, 64], sizes = [8, 32], strides = [1, 1]} : vector<8x128xf32> to vector<8x32xf32>
    %32 = math.tanh %31 : vector<8x32xf32>
    %33 = vector.extract_strided_slice %14 {offsets = [0, 96], sizes = [8, 32], strides = [1, 1]} : vector<8x128xf32> to vector<8x32xf32>
    %cst_17 = arith.constant 5.000000e-01 : f32
    %34 = vector.broadcast %cst_17 : f32 to vector<8x32xf32>
    %35 = arith.mulf %34, %33 : vector<8x32xf32>
    %36 = math.tanh %35 : vector<8x32xf32>
    %cst_18 = arith.constant 1.000000e+00 : f32
    %37 = vector.broadcast %cst_18 : f32 to vector<8x32xf32>
    %38 = arith.addf %36, %37 : vector<8x32xf32>
    %cst_19 = arith.constant 5.000000e-01 : f32
    %39 = vector.broadcast %cst_19 : f32 to vector<8x32xf32>
    %40 = arith.mulf %39, %38 : vector<8x32xf32>
    %41 = arith.mulf %30, %10 : vector<8x32xf32>
    %42 = arith.mulf %22, %32 : vector<8x32xf32>
    %43 = arith.addf %41, %42 : vector<8x32xf32>
    %44 = math.tanh %43 : vector<8x32xf32>
    %45 = arith.mulf %40, %44 : vector<8x32xf32>
    %46 = vector.extract_strided_slice %7 {offsets = [1, 0, 0], sizes = [1, 8, 128], strides = [1, 1, 1]} : vector<8x8x128xf32> to vector<1x8x128xf32>
    %47 = vector.shape_cast %46 : vector<1x8x128xf32> to vector<8x128xf32>
    %cst_20 = arith.constant dense<0.000000e+00> : vector<8x128xf32>
    %48 = tpu.matmul %45, %8, %cst_20 {dimension_numbers = #tpu.dot_dimension_numbers<[1], [0], [0], [1], [0, 0, 1, 1], [], []>} : vector<8x32xf32>, vector<32x128xf32>, vector<8x128xf32> -> vector<8x128xf32>
    %49 = arith.addf %47, %48 : vector<8x128xf32>
    %50 = vector.extract_strided_slice %49 {offsets = [0, 0], sizes = [8, 32], strides = [1, 1]} : vector<8x128xf32> to vector<8x32xf32>
    %cst_21 = arith.constant 5.000000e-01 : f32
    %51 = vector.broadcast %cst_21 : f32 to vector<8x32xf32>
    %52 = arith.mulf %51, %50 : vector<8x32xf32>
    %53 = math.tanh %52 : vector<8x32xf32>
    %cst_22 = arith.constant 1.000000e+00 : f32
    %54 = vector.broadcast %cst_22 : f32 to vector<8x32xf32>
    %55 = arith.addf %53, %54 : vector<8x32xf32>
    %cst_23 = arith.constant 5.000000e-01 : f32
    %56 = vector.broadcast %cst_23 : f32 to vector<8x32xf32>
    %57 = arith.mulf %56, %55 : vector<8x32xf32>
    %58 = vector.extract_strided_slice %49 {offsets = [0, 32], sizes = [8, 32], strides = [1, 1]} : vector<8x128xf32> to vector<8x32xf32>
    %cst_24 = arith.constant 5.000000e-01 : f32
    %59 = vector.broadcast %cst_24 : f32 to vector<8x32xf32>
    %60 = arith.mulf %59, %58 : vector<8x32xf32>
    %61 = math.tanh %60 : vector<8x32xf32>
    %cst_25 = arith.constant 1.000000e+00 : f32
    %62 = vector.broadcast %cst_25 : f32 to vector<8x32xf32>
    %63 = arith.addf %61, %62 : vector<8x32xf32>
    %cst_26 = arith.constant 5.000000e-01 : f32
    %64 = vector.broadcast %cst_26 : f32 to vector<8x32xf32>
    %65 = arith.mulf %64, %63 : vector<8x32xf32>
    %66 = vector.extract_strided_slice %49 {offsets = [0, 64], sizes = [8, 32], strides = [1, 1]} : vector<8x128xf32> to vector<8x32xf32>
    %67 = math.tanh %66 : vector<8x32xf32>
    %68 = vector.extract_strided_slice %49 {offsets = [0, 96], sizes = [8, 32], strides = [1, 1]} : vector<8x128xf32> to vector<8x32xf32>
    %cst_27 = arith.constant 5.000000e-01 : f32
    %69 = vector.broadcast %cst_27 : f32 to vector<8x32xf32>
    %70 = arith.mulf %69, %68 : vector<8x32xf32>
    %71 = math.tanh %70 : vector<8x32xf32>
    %cst_28 = arith.constant 1.000000e+00 : f32
    %72 = vector.broadcast %cst_28 : f32 to vector<8x32xf32>
    %73 = arith.addf %71, %72 : vector<8x32xf32>
    %cst_29 = arith.constant 5.000000e-01 : f32
    %74 = vector.broadcast %cst_29 : f32 to vector<8x32xf32>
    %75 = arith.mulf %74, %73 : vector<8x32xf32>
    %76 = arith.mulf %65, %43 : vector<8x32xf32>
    %77 = arith.mulf %57, %67 : vector<8x32xf32>
    %78 = arith.addf %76, %77 : vector<8x32xf32>
    %79 = math.tanh %78 : vector<8x32xf32>
    %80 = arith.mulf %75, %79 : vector<8x32xf32>
    %81 = vector.extract_strided_slice %7 {offsets = [2, 0, 0], sizes = [1, 8, 128], strides = [1, 1, 1]} : vector<8x8x128xf32> to vector<1x8x128xf32>
    %82 = vector.shape_cast %81 : vector<1x8x128xf32> to vector<8x128xf32>
    %cst_30 = arith.constant dense<0.000000e+00> : vector<8x128xf32>
    %83 = tpu.matmul %80, %8, %cst_30 {dimension_numbers = #tpu.dot_dimension_numbers<[1], [0], [0], [1], [0, 0, 1, 1], [], []>} : vector<8x32xf32>, vector<32x128xf32>, vector<8x128xf32> -> vector<8x128xf32>
    %84 = arith.addf %82, %83 : vector<8x128xf32>
    %85 = vector.extract_strided_slice %84 {offsets = [0, 0], sizes = [8, 32], strides = [1, 1]} : vector<8x128xf32> to vector<8x32xf32>
    %cst_31 = arith.constant 5.000000e-01 : f32
    %86 = vector.broadcast %cst_31 : f32 to vector<8x32xf32>
    %87 = arith.mulf %86, %85 : vector<8x32xf32>
    %88 = math.tanh %87 : vector<8x32xf32>
    %cst_32 = arith.constant 1.000000e+00 : f32
    %89 = vector.broadcast %cst_32 : f32 to vector<8x32xf32>
    %90 = arith.addf %88, %89 : vector<8x32xf32>
    %cst_33 = arith.constant 5.000000e-01 : f32
    %91 = vector.broadcast %cst_33 : f32 to vector<8x32xf32>
    %92 = arith.mulf %91, %90 : vector<8x32xf32>
    %93 = vector.extract_strided_slice %84 {offsets = [0, 32], sizes = [8, 32], strides = [1, 1]} : vector<8x128xf32> to vector<8x32xf32>
    %cst_34 = arith.constant 5.000000e-01 : f32
    %94 = vector.broadcast %cst_34 : f32 to vector<8x32xf32>
    %95 = arith.mulf %94, %93 : vector<8x32xf32>
    %96 = math.tanh %95 : vector<8x32xf32>
    %cst_35 = arith.constant 1.000000e+00 : f32
    %97 = vector.broadcast %cst_35 : f32 to vector<8x32xf32>
    %98 = arith.addf %96, %97 : vector<8x32xf32>
    %cst_36 = arith.constant 5.000000e-01 : f32
    %99 = vector.broadcast %cst_36 : f32 to vector<8x32xf32>
    %100 = arith.mulf %99, %98 : vector<8x32xf32>
    %101 = vector.extract_strided_slice %84 {offsets = [0, 64], sizes = [8, 32], strides = [1, 1]} : vector<8x128xf32> to vector<8x32xf32>
    %102 = math.tanh %101 : vector<8x32xf32>
    %103 = vector.extract_strided_slice %84 {offsets = [0, 96], sizes = [8, 32], strides = [1, 1]} : vector<8x128xf32> to vector<8x32xf32>
    %cst_37 = arith.constant 5.000000e-01 : f32
    %104 = vector.broadcast %cst_37 : f32 to vector<8x32xf32>
    %105 = arith.mulf %104, %103 : vector<8x32xf32>
    %106 = math.tanh %105 : vector<8x32xf32>
    %cst_38 = arith.constant 1.000000e+00 : f32
    %107 = vector.broadcast %cst_38 : f32 to vector<8x32xf32>
    %108 = arith.addf %106, %107 : vector<8x32xf32>
    %cst_39 = arith.constant 5.000000e-01 : f32
    %109 = vector.broadcast %cst_39 : f32 to vector<8x32xf32>
    %110 = arith.mulf %109, %108 : vector<8x32xf32>
    %111 = arith.mulf %100, %78 : vector<8x32xf32>
    %112 = arith.mulf %92, %102 : vector<8x32xf32>
    %113 = arith.addf %111, %112 : vector<8x32xf32>
    %114 = math.tanh %113 : vector<8x32xf32>
    %115 = arith.mulf %110, %114 : vector<8x32xf32>
    %116 = vector.extract_strided_slice %7 {offsets = [3, 0, 0], sizes = [1, 8, 128], strides = [1, 1, 1]} : vector<8x8x128xf32> to vector<1x8x128xf32>
    %117 = vector.shape_cast %116 : vector<1x8x128xf32> to vector<8x128xf32>
    %cst_40 = arith.constant dense<0.000000e+00> : vector<8x128xf32>
    %118 = tpu.matmul %115, %8, %cst_40 {dimension_numbers = #tpu.dot_dimension_numbers<[1], [0], [0], [1], [0, 0, 1, 1], [], []>} : vector<8x32xf32>, vector<32x128xf32>, vector<8x128xf32> -> vector<8x128xf32>
    %119 = arith.addf %117, %118 : vector<8x128xf32>
    %120 = vector.extract_strided_slice %119 {offsets = [0, 0], sizes = [8, 32], strides = [1, 1]} : vector<8x128xf32> to vector<8x32xf32>
    %cst_41 = arith.constant 5.000000e-01 : f32
    %121 = vector.broadcast %cst_41 : f32 to vector<8x32xf32>
    %122 = arith.mulf %121, %120 : vector<8x32xf32>
    %123 = math.tanh %122 : vector<8x32xf32>
    %cst_42 = arith.constant 1.000000e+00 : f32
    %124 = vector.broadcast %cst_42 : f32 to vector<8x32xf32>
    %125 = arith.addf %123, %124 : vector<8x32xf32>
    %cst_43 = arith.constant 5.000000e-01 : f32
    %126 = vector.broadcast %cst_43 : f32 to vector<8x32xf32>
    %127 = arith.mulf %126, %125 : vector<8x32xf32>
    %128 = vector.extract_strided_slice %119 {offsets = [0, 32], sizes = [8, 32], strides = [1, 1]} : vector<8x128xf32> to vector<8x32xf32>
    %cst_44 = arith.constant 5.000000e-01 : f32
    %129 = vector.broadcast %cst_44 : f32 to vector<8x32xf32>
    %130 = arith.mulf %129, %128 : vector<8x32xf32>
    %131 = math.tanh %130 : vector<8x32xf32>
    %cst_45 = arith.constant 1.000000e+00 : f32
    %132 = vector.broadcast %cst_45 : f32 to vector<8x32xf32>
    %133 = arith.addf %131, %132 : vector<8x32xf32>
    %cst_46 = arith.constant 5.000000e-01 : f32
    %134 = vector.broadcast %cst_46 : f32 to vector<8x32xf32>
    %135 = arith.mulf %134, %133 : vector<8x32xf32>
    %136 = vector.extract_strided_slice %119 {offsets = [0, 64], sizes = [8, 32], strides = [1, 1]} : vector<8x128xf32> to vector<8x32xf32>
    %137 = math.tanh %136 : vector<8x32xf32>
    %138 = vector.extract_strided_slice %119 {offsets = [0, 96], sizes = [8, 32], strides = [1, 1]} : vector<8x128xf32> to vector<8x32xf32>
    %cst_47 = arith.constant 5.000000e-01 : f32
    %139 = vector.broadcast %cst_47 : f32 to vector<8x32xf32>
    %140 = arith.mulf %139, %138 : vector<8x32xf32>
    %141 = math.tanh %140 : vector<8x32xf32>
    %cst_48 = arith.constant 1.000000e+00 : f32
    %142 = vector.broadcast %cst_48 : f32 to vector<8x32xf32>
    %143 = arith.addf %141, %142 : vector<8x32xf32>
    %cst_49 = arith.constant 5.000000e-01 : f32
    %144 = vector.broadcast %cst_49 : f32 to vector<8x32xf32>
    %145 = arith.mulf %144, %143 : vector<8x32xf32>
    %146 = arith.mulf %135, %113 : vector<8x32xf32>
    %147 = arith.mulf %127, %137 : vector<8x32xf32>
    %148 = arith.addf %146, %147 : vector<8x32xf32>
    %149 = math.tanh %148 : vector<8x32xf32>
    %150 = arith.mulf %145, %149 : vector<8x32xf32>
    %151 = vector.extract_strided_slice %7 {offsets = [4, 0, 0], sizes = [1, 8, 128], strides = [1, 1, 1]} : vector<8x8x128xf32> to vector<1x8x128xf32>
    %152 = vector.shape_cast %151 : vector<1x8x128xf32> to vector<8x128xf32>
    %cst_50 = arith.constant dense<0.000000e+00> : vector<8x128xf32>
    %153 = tpu.matmul %150, %8, %cst_50 {dimension_numbers = #tpu.dot_dimension_numbers<[1], [0], [0], [1], [0, 0, 1, 1], [], []>} : vector<8x32xf32>, vector<32x128xf32>, vector<8x128xf32> -> vector<8x128xf32>
    %154 = arith.addf %152, %153 : vector<8x128xf32>
    %155 = vector.extract_strided_slice %154 {offsets = [0, 0], sizes = [8, 32], strides = [1, 1]} : vector<8x128xf32> to vector<8x32xf32>
    %cst_51 = arith.constant 5.000000e-01 : f32
    %156 = vector.broadcast %cst_51 : f32 to vector<8x32xf32>
    %157 = arith.mulf %156, %155 : vector<8x32xf32>
    %158 = math.tanh %157 : vector<8x32xf32>
    %cst_52 = arith.constant 1.000000e+00 : f32
    %159 = vector.broadcast %cst_52 : f32 to vector<8x32xf32>
    %160 = arith.addf %158, %159 : vector<8x32xf32>
    %cst_53 = arith.constant 5.000000e-01 : f32
    %161 = vector.broadcast %cst_53 : f32 to vector<8x32xf32>
    %162 = arith.mulf %161, %160 : vector<8x32xf32>
    %163 = vector.extract_strided_slice %154 {offsets = [0, 32], sizes = [8, 32], strides = [1, 1]} : vector<8x128xf32> to vector<8x32xf32>
    %cst_54 = arith.constant 5.000000e-01 : f32
    %164 = vector.broadcast %cst_54 : f32 to vector<8x32xf32>
    %165 = arith.mulf %164, %163 : vector<8x32xf32>
    %166 = math.tanh %165 : vector<8x32xf32>
    %cst_55 = arith.constant 1.000000e+00 : f32
    %167 = vector.broadcast %cst_55 : f32 to vector<8x32xf32>
    %168 = arith.addf %166, %167 : vector<8x32xf32>
    %cst_56 = arith.constant 5.000000e-01 : f32
    %169 = vector.broadcast %cst_56 : f32 to vector<8x32xf32>
    %170 = arith.mulf %169, %168 : vector<8x32xf32>
    %171 = vector.extract_strided_slice %154 {offsets = [0, 64], sizes = [8, 32], strides = [1, 1]} : vector<8x128xf32> to vector<8x32xf32>
    %172 = math.tanh %171 : vector<8x32xf32>
    %173 = vector.extract_strided_slice %154 {offsets = [0, 96], sizes = [8, 32], strides = [1, 1]} : vector<8x128xf32> to vector<8x32xf32>
    %cst_57 = arith.constant 5.000000e-01 : f32
    %174 = vector.broadcast %cst_57 : f32 to vector<8x32xf32>
    %175 = arith.mulf %174, %173 : vector<8x32xf32>
    %176 = math.tanh %175 : vector<8x32xf32>
    %cst_58 = arith.constant 1.000000e+00 : f32
    %177 = vector.broadcast %cst_58 : f32 to vector<8x32xf32>
    %178 = arith.addf %176, %177 : vector<8x32xf32>
    %cst_59 = arith.constant 5.000000e-01 : f32
    %179 = vector.broadcast %cst_59 : f32 to vector<8x32xf32>
    %180 = arith.mulf %179, %178 : vector<8x32xf32>
    %181 = arith.mulf %170, %148 : vector<8x32xf32>
    %182 = arith.mulf %162, %172 : vector<8x32xf32>
    %183 = arith.addf %181, %182 : vector<8x32xf32>
    %184 = math.tanh %183 : vector<8x32xf32>
    %185 = arith.mulf %180, %184 : vector<8x32xf32>
    %186 = vector.extract_strided_slice %7 {offsets = [5, 0, 0], sizes = [1, 8, 128], strides = [1, 1, 1]} : vector<8x8x128xf32> to vector<1x8x128xf32>
    %187 = vector.shape_cast %186 : vector<1x8x128xf32> to vector<8x128xf32>
    %cst_60 = arith.constant dense<0.000000e+00> : vector<8x128xf32>
    %188 = tpu.matmul %185, %8, %cst_60 {dimension_numbers = #tpu.dot_dimension_numbers<[1], [0], [0], [1], [0, 0, 1, 1], [], []>} : vector<8x32xf32>, vector<32x128xf32>, vector<8x128xf32> -> vector<8x128xf32>
    %189 = arith.addf %187, %188 : vector<8x128xf32>
    %190 = vector.extract_strided_slice %189 {offsets = [0, 0], sizes = [8, 32], strides = [1, 1]} : vector<8x128xf32> to vector<8x32xf32>
    %cst_61 = arith.constant 5.000000e-01 : f32
    %191 = vector.broadcast %cst_61 : f32 to vector<8x32xf32>
    %192 = arith.mulf %191, %190 : vector<8x32xf32>
    %193 = math.tanh %192 : vector<8x32xf32>
    %cst_62 = arith.constant 1.000000e+00 : f32
    %194 = vector.broadcast %cst_62 : f32 to vector<8x32xf32>
    %195 = arith.addf %193, %194 : vector<8x32xf32>
    %cst_63 = arith.constant 5.000000e-01 : f32
    %196 = vector.broadcast %cst_63 : f32 to vector<8x32xf32>
    %197 = arith.mulf %196, %195 : vector<8x32xf32>
    %198 = vector.extract_strided_slice %189 {offsets = [0, 32], sizes = [8, 32], strides = [1, 1]} : vector<8x128xf32> to vector<8x32xf32>
    %cst_64 = arith.constant 5.000000e-01 : f32
    %199 = vector.broadcast %cst_64 : f32 to vector<8x32xf32>
    %200 = arith.mulf %199, %198 : vector<8x32xf32>
    %201 = math.tanh %200 : vector<8x32xf32>
    %cst_65 = arith.constant 1.000000e+00 : f32
    %202 = vector.broadcast %cst_65 : f32 to vector<8x32xf32>
    %203 = arith.addf %201, %202 : vector<8x32xf32>
    %cst_66 = arith.constant 5.000000e-01 : f32
    %204 = vector.broadcast %cst_66 : f32 to vector<8x32xf32>
    %205 = arith.mulf %204, %203 : vector<8x32xf32>
    %206 = vector.extract_strided_slice %189 {offsets = [0, 64], sizes = [8, 32], strides = [1, 1]} : vector<8x128xf32> to vector<8x32xf32>
    %207 = math.tanh %206 : vector<8x32xf32>
    %208 = vector.extract_strided_slice %189 {offsets = [0, 96], sizes = [8, 32], strides = [1, 1]} : vector<8x128xf32> to vector<8x32xf32>
    %cst_67 = arith.constant 5.000000e-01 : f32
    %209 = vector.broadcast %cst_67 : f32 to vector<8x32xf32>
    %210 = arith.mulf %209, %208 : vector<8x32xf32>
    %211 = math.tanh %210 : vector<8x32xf32>
    %cst_68 = arith.constant 1.000000e+00 : f32
    %212 = vector.broadcast %cst_68 : f32 to vector<8x32xf32>
    %213 = arith.addf %211, %212 : vector<8x32xf32>
    %cst_69 = arith.constant 5.000000e-01 : f32
    %214 = vector.broadcast %cst_69 : f32 to vector<8x32xf32>
    %215 = arith.mulf %214, %213 : vector<8x32xf32>
    %216 = arith.mulf %205, %183 : vector<8x32xf32>
    %217 = arith.mulf %197, %207 : vector<8x32xf32>
    %218 = arith.addf %216, %217 : vector<8x32xf32>
    %219 = math.tanh %218 : vector<8x32xf32>
    %220 = arith.mulf %215, %219 : vector<8x32xf32>
    %221 = vector.extract_strided_slice %7 {offsets = [6, 0, 0], sizes = [1, 8, 128], strides = [1, 1, 1]} : vector<8x8x128xf32> to vector<1x8x128xf32>
    %222 = vector.shape_cast %221 : vector<1x8x128xf32> to vector<8x128xf32>
    %cst_70 = arith.constant dense<0.000000e+00> : vector<8x128xf32>
    %223 = tpu.matmul %220, %8, %cst_70 {dimension_numbers = #tpu.dot_dimension_numbers<[1], [0], [0], [1], [0, 0, 1, 1], [], []>} : vector<8x32xf32>, vector<32x128xf32>, vector<8x128xf32> -> vector<8x128xf32>
    %224 = arith.addf %222, %223 : vector<8x128xf32>
    %225 = vector.extract_strided_slice %224 {offsets = [0, 0], sizes = [8, 32], strides = [1, 1]} : vector<8x128xf32> to vector<8x32xf32>
    %cst_71 = arith.constant 5.000000e-01 : f32
    %226 = vector.broadcast %cst_71 : f32 to vector<8x32xf32>
    %227 = arith.mulf %226, %225 : vector<8x32xf32>
    %228 = math.tanh %227 : vector<8x32xf32>
    %cst_72 = arith.constant 1.000000e+00 : f32
    %229 = vector.broadcast %cst_72 : f32 to vector<8x32xf32>
    %230 = arith.addf %228, %229 : vector<8x32xf32>
    %cst_73 = arith.constant 5.000000e-01 : f32
    %231 = vector.broadcast %cst_73 : f32 to vector<8x32xf32>
    %232 = arith.mulf %231, %230 : vector<8x32xf32>
    %233 = vector.extract_strided_slice %224 {offsets = [0, 32], sizes = [8, 32], strides = [1, 1]} : vector<8x128xf32> to vector<8x32xf32>
    %cst_74 = arith.constant 5.000000e-01 : f32
    %234 = vector.broadcast %cst_74 : f32 to vector<8x32xf32>
    %235 = arith.mulf %234, %233 : vector<8x32xf32>
    %236 = math.tanh %235 : vector<8x32xf32>
    %cst_75 = arith.constant 1.000000e+00 : f32
    %237 = vector.broadcast %cst_75 : f32 to vector<8x32xf32>
    %238 = arith.addf %236, %237 : vector<8x32xf32>
    %cst_76 = arith.constant 5.000000e-01 : f32
    %239 = vector.broadcast %cst_76 : f32 to vector<8x32xf32>
    %240 = arith.mulf %239, %238 : vector<8x32xf32>
    %241 = vector.extract_strided_slice %224 {offsets = [0, 64], sizes = [8, 32], strides = [1, 1]} : vector<8x128xf32> to vector<8x32xf32>
    %242 = math.tanh %241 : vector<8x32xf32>
    %243 = vector.extract_strided_slice %224 {offsets = [0, 96], sizes = [8, 32], strides = [1, 1]} : vector<8x128xf32> to vector<8x32xf32>
    %cst_77 = arith.constant 5.000000e-01 : f32
    %244 = vector.broadcast %cst_77 : f32 to vector<8x32xf32>
    %245 = arith.mulf %244, %243 : vector<8x32xf32>
    %246 = math.tanh %245 : vector<8x32xf32>
    %cst_78 = arith.constant 1.000000e+00 : f32
    %247 = vector.broadcast %cst_78 : f32 to vector<8x32xf32>
    %248 = arith.addf %246, %247 : vector<8x32xf32>
    %cst_79 = arith.constant 5.000000e-01 : f32
    %249 = vector.broadcast %cst_79 : f32 to vector<8x32xf32>
    %250 = arith.mulf %249, %248 : vector<8x32xf32>
    %251 = arith.mulf %240, %218 : vector<8x32xf32>
    %252 = arith.mulf %232, %242 : vector<8x32xf32>
    %253 = arith.addf %251, %252 : vector<8x32xf32>
    %254 = math.tanh %253 : vector<8x32xf32>
    %255 = arith.mulf %250, %254 : vector<8x32xf32>
    %256 = vector.extract_strided_slice %7 {offsets = [7, 0, 0], sizes = [1, 8, 128], strides = [1, 1, 1]} : vector<8x8x128xf32> to vector<1x8x128xf32>
    %257 = vector.shape_cast %256 : vector<1x8x128xf32> to vector<8x128xf32>
    %cst_80 = arith.constant dense<0.000000e+00> : vector<8x128xf32>
    %258 = tpu.matmul %255, %8, %cst_80 {dimension_numbers = #tpu.dot_dimension_numbers<[1], [0], [0], [1], [0, 0, 1, 1], [], []>} : vector<8x32xf32>, vector<32x128xf32>, vector<8x128xf32> -> vector<8x128xf32>
    %259 = arith.addf %257, %258 : vector<8x128xf32>
    %260 = vector.extract_strided_slice %259 {offsets = [0, 0], sizes = [8, 32], strides = [1, 1]} : vector<8x128xf32> to vector<8x32xf32>
    %cst_81 = arith.constant 5.000000e-01 : f32
    %261 = vector.broadcast %cst_81 : f32 to vector<8x32xf32>
    %262 = arith.mulf %261, %260 : vector<8x32xf32>
    %263 = math.tanh %262 : vector<8x32xf32>
    %cst_82 = arith.constant 1.000000e+00 : f32
    %264 = vector.broadcast %cst_82 : f32 to vector<8x32xf32>
    %265 = arith.addf %263, %264 : vector<8x32xf32>
    %cst_83 = arith.constant 5.000000e-01 : f32
    %266 = vector.broadcast %cst_83 : f32 to vector<8x32xf32>
    %267 = arith.mulf %266, %265 : vector<8x32xf32>
    %268 = vector.extract_strided_slice %259 {offsets = [0, 32], sizes = [8, 32], strides = [1, 1]} : vector<8x128xf32> to vector<8x32xf32>
    %cst_84 = arith.constant 5.000000e-01 : f32
    %269 = vector.broadcast %cst_84 : f32 to vector<8x32xf32>
    %270 = arith.mulf %269, %268 : vector<8x32xf32>
    %271 = math.tanh %270 : vector<8x32xf32>
    %cst_85 = arith.constant 1.000000e+00 : f32
    %272 = vector.broadcast %cst_85 : f32 to vector<8x32xf32>
    %273 = arith.addf %271, %272 : vector<8x32xf32>
    %cst_86 = arith.constant 5.000000e-01 : f32
    %274 = vector.broadcast %cst_86 : f32 to vector<8x32xf32>
    %275 = arith.mulf %274, %273 : vector<8x32xf32>
    %276 = vector.extract_strided_slice %259 {offsets = [0, 64], sizes = [8, 32], strides = [1, 1]} : vector<8x128xf32> to vector<8x32xf32>
    %277 = math.tanh %276 : vector<8x32xf32>
    %278 = vector.extract_strided_slice %259 {offsets = [0, 96], sizes = [8, 32], strides = [1, 1]} : vector<8x128xf32> to vector<8x32xf32>
    %cst_87 = arith.constant 5.000000e-01 : f32
    %279 = vector.broadcast %cst_87 : f32 to vector<8x32xf32>
    %280 = arith.mulf %279, %278 : vector<8x32xf32>
    %281 = math.tanh %280 : vector<8x32xf32>
    %cst_88 = arith.constant 1.000000e+00 : f32
    %282 = vector.broadcast %cst_88 : f32 to vector<8x32xf32>
    %283 = arith.addf %281, %282 : vector<8x32xf32>
    %cst_89 = arith.constant 5.000000e-01 : f32
    %284 = vector.broadcast %cst_89 : f32 to vector<8x32xf32>
    %285 = arith.mulf %284, %283 : vector<8x32xf32>
    %286 = arith.mulf %275, %253 : vector<8x32xf32>
    %287 = arith.mulf %267, %277 : vector<8x32xf32>
    %288 = arith.addf %286, %287 : vector<8x32xf32>
    %289 = math.tanh %288 : vector<8x32xf32>
    %290 = arith.mulf %285, %289 : vector<8x32xf32>
    %c0_90 = arith.constant 0 : index
    %c0_91 = arith.constant 0 : index
    %291 = vector.load %arg2[%c0_90, %c0_91] : memref<8x768xf32, #tpu.memory_space<vmem>>, vector<8x768xf32>
    %c0_92 = arith.constant 0 : index
    %c0_93 = arith.constant 0 : index
    %292 = vector.load %arg6[%c0_92, %c0_93] : memref<1x32xf32, #tpu.memory_space<vmem>>, vector<1x32xf32>
    %293 = vector.broadcast %292 : vector<1x32xf32> to vector<8x32xf32>
    %294 = arith.mulf %290, %293 : vector<8x32xf32>
    %cst_94 = arith.constant dense<0.000000e+00> : vector<8xf32>
    %295 = vector.multi_reduction <add>, %294, %cst_94 [1] : vector<8x32xf32> to vector<8xf32>
    %296 = vector.shape_cast %295 : vector<8xf32> to vector<8x1xf32>
    %c0_95 = arith.constant 0 : index
    %c0_96 = arith.constant 0 : index
    %297 = vector.load %arg7[%c0_95, %c0_96] : memref<1x768xf32, #tpu.memory_space<vmem>>, vector<1x768xf32>
    %298 = vector.broadcast %297 : vector<1x768xf32> to vector<8x768xf32>
    %299 = arith.mulf %291, %298 : vector<8x768xf32>
    %cst_97 = arith.constant dense<0.000000e+00> : vector<8xf32>
    %300 = vector.multi_reduction <add>, %299, %cst_97 [1] : vector<8x768xf32> to vector<8xf32>
    %301 = vector.shape_cast %300 : vector<8xf32> to vector<8x1xf32>
    %302 = arith.addf %296, %301 : vector<8x1xf32>
    %c0_98 = arith.constant 0 : index
    %c0_99 = arith.constant 0 : index
    %303 = vector.load %arg8[%c0_98, %c0_99] : memref<1x1xf32, #tpu.memory_space<vmem>>, vector<1x1xf32>
    %304 = vector.broadcast %303 : vector<1x1xf32> to vector<8x1xf32>
    %305 = arith.addf %302, %304 : vector<8x1xf32>
    %c0_100 = arith.constant 0 : index
    %c0_101 = arith.constant 0 : index
    %306 = vector.load %arg9[%c0_100, %c0_101] : memref<8x1xf32, #tpu.memory_space<vmem>>, vector<8x1xf32>
    tpu.vector_store %arg9[%c0_100, %c0_101], %305 {strides = array<i32>} : memref<8x1xf32, #tpu.memory_space<vmem>>, vector<8x1xf32>,
    return
  }
  func.func @transform_0(%arg0: i32) -> (i32, i32, i32) {
    %c0_i32 = arith.constant 0 : i32
    %c0_i32_0 = arith.constant 0 : i32
    %c0_i32_1 = arith.constant 0 : i32
    return %c0_i32, %arg0, %c0_i32_0 : i32, i32, i32
  }
  func.func @transform_1(%arg0: i32) -> (i32, i32) {
    %c0_i32 = arith.constant 0 : i32
    %c0_i32_0 = arith.constant 0 : i32
    return %arg0, %c0_i32 : i32, i32
  }
  func.func @transform_2(%arg0: i32) -> (i32, i32) {
    %c0_i32 = arith.constant 0 : i32
    %c0_i32_0 = arith.constant 0 : i32
    %c0_i32_1 = arith.constant 0 : i32
    return %c0_i32, %c0_i32_0 : i32, i32
  }
  func.func @transform_3(%arg0: i32) -> (i32, i32) {
    %c0_i32 = arith.constant 0 : i32
    %c0_i32_0 = arith.constant 0 : i32
    %c0_i32_1 = arith.constant 0 : i32
    return %c0_i32, %c0_i32_0 : i32, i32
  }
  func.func @transform_4(%arg0: i32) -> (i32, i32) {
    %c0_i32 = arith.constant 0 : i32
    %c0_i32_0 = arith.constant 0 : i32
    %c0_i32_1 = arith.constant 0 : i32
    return %c0_i32, %c0_i32_0 : i32, i32
  }
  func.func @transform_5(%arg0: i32) -> (i32, i32) {
    %c0_i32 = arith.constant 0 : i32
    %c0_i32_0 = arith.constant 0 : i32
    %c0_i32_1 = arith.constant 0 : i32
    return %c0_i32, %c0_i32_0 : i32, i32
  }
  func.func @transform_6(%arg0: i32) -> (i32, i32) {
    %c0_i32 = arith.constant 0 : i32
    %c0_i32_0 = arith.constant 0 : i32
    %c0_i32_1 = arith.constant 0 : i32
    return %c0_i32, %c0_i32_0 : i32, i32
  }
  func.func @transform_7(%arg0: i32) -> (i32, i32) {
    %c0_i32 = arith.constant 0 : i32
    %c0_i32_0 = arith.constant 0 : i32
    %c0_i32_1 = arith.constant 0 : i32
    return %c0_i32, %c0_i32_0 : i32, i32
  }
  func.func @transform_8(%arg0: i32) -> (i32, i32) {
    %c0_i32 = arith.constant 0 : i32
    %c0_i32_0 = arith.constant 0 : i32
    return %arg0, %c0_i32 : i32, i32
  }
}

</mosaic_0001>

<llo_original>
// kernel: _lambda_.1
$region0: #{_lambda_.1}
  #allocation0 [shape = 'u32[]', space=smem, size = 0x4, offset = 0x4, fixed_abs, tag = 'smem constant byte address 0x4 - core index']
  #allocation1 [shape = 'u32[72,128]{1,0:T(1,128)}', space=vmem, size = 0x9000, scoped, tag = 'internal scratch']
  #allocation2 [shape = 'f32[1,1]{1,0:T(1,128)S(1)}', space=vmem, size = 0x200, scoped, tag = 'scoped memory for _lambda_.1']
  %s0 = inlined_call_operand.vmem [shape: f32[8,8,32], index: 0, kind: input, shape index: {}]
  %s1 = inlined_call_operand.vmem [shape: f32[8,768], index: 1, kind: input, shape index: {}]
  %s2 = inlined_call_operand.vmem [shape: f32[32,128], index: 2, kind: input, shape index: {}]
  %s3 = inlined_call_operand.vmem [shape: f32[32,128], index: 3, kind: input, shape index: {}]
  %s4 = inlined_call_operand.vmem [shape: f32[1,128], index: 4, kind: input, shape index: {}]
  %s5 = inlined_call_operand.vmem [shape: f32[1,32], index: 5, kind: input, shape index: {}]
  %s6 = inlined_call_operand.vmem [shape: f32[1,768], index: 6, kind: input, shape index: {}]
  %s7 = inlined_call_operand.<no memory space> [shape: f32[1,1], index: 7, kind: input, shape index: {}]
  %s8 = inlined_call_operand.vmem [shape: f32[8,1], index: 8, kind: output, shape index: {}]
  %s9 = sld [smem:[#allocation0]]
  $region42: #{_lambda_.1} parent=0
    _
  %s11 = ssub.s32 1, %s9
  %s12 = scalar_select 0, %s11, %s9
  %v13 = vstv %s7
  %14 = vst [vmem:[#allocation2] sm:$0x1] %v13
  // Predicated region
  $region2: #{_lambda_.1} parent=0 // pred_check
    _
  $region3: #{_lambda_.1} parent=0 // pred_check_branch
    %16 = sbr.rel (0) target = $region5
  $region4: #{_lambda_.1} parent=0 // pred_region
    _
  $region5: #{_lambda_.1} parent=0 // pred_fallthru
    _
  // Predicated region
  $region6: #{_lambda_.1} parent=0 // pred_check
    _
  $region7: #{_lambda_.1} parent=0 // pred_check_branch
    %18 = sbr.rel (0) target = $region9
  $region8: #{_lambda_.1} parent=0 // pred_region
    _
  $region9: #{_lambda_.1} parent=0 // pred_fallthru
    _
  // Predicated region
  $region10: #{_lambda_.1} parent=0 // pred_check
    _
  $region11: #{_lambda_.1} parent=0 // pred_check_branch
    %20 = sbr.rel (0) target = $region13
  $region12: #{_lambda_.1} parent=0 // pred_region
    _
  $region13: #{_lambda_.1} parent=0 // pred_fallthru
    _
  // Predicated region
  $region14: #{_lambda_.1} parent=0 // pred_check
    _
  $region15: #{_lambda_.1} parent=0 // pred_check_branch
    %22 = sbr.rel (0) target = $region17
  $region16: #{_lambda_.1} parent=0 // pred_region
    _
  $region17: #{_lambda_.1} parent=0 // pred_fallthru
    _
  // Predicated region
  $region18: #{_lambda_.1} parent=0 // pred_check
    _
  $region19: #{_lambda_.1} parent=0 // pred_check_branch
    %24 = sbr.rel (0) target = $region21
  $region20: #{_lambda_.1} parent=0 // pred_region
    _
  $region21: #{_lambda_.1} parent=0 // pred_fallthru
    _
  // Predicated region
  $region22: #{_lambda_.1} parent=0 // pred_check
    _
  $region23: #{_lambda_.1} parent=0 // pred_check_branch
    %26 = sbr.rel (0) target = $region25
  $region24: #{_lambda_.1} parent=0 // pred_region
    _
  $region25: #{_lambda_.1} parent=0 // pred_fallthru
    _
  // Predicated region
  $region26: #{_lambda_.1} parent=0 // pred_check
    _
  $region27: #{_lambda_.1} parent=0 // pred_check_branch
    %28 = sbr.rel (0) target = $region29
  $region28: #{_lambda_.1} parent=0 // pred_region
    _
  $region29: #{_lambda_.1} parent=0 // pred_fallthru
    _
  // Predicated region
  $region30: #{_lambda_.1} parent=0 // pred_check
    _
  $region31: #{_lambda_.1} parent=0 // pred_check_branch
    %30 = sbr.rel (0) target = $region33
  $region32: #{_lambda_.1} parent=0 // pred_region
    _
  $region33: #{_lambda_.1} parent=0 // pred_fallthru
    _
  %v31 = vld [vmem:[%s0] sm:$0xff]
  %v32 = vld [vmem:[%s0 + $0x8] sm:$0xff]
  %v33 = vld [vmem:[%s0 + $0x10] sm:$0xff]
  %v34 = vld [vmem:[%s0 + $0x18] sm:$0xff]
  %v35 = vld [vmem:[%s0 + $0x20] sm:$0xff]
  %v36 = vld [vmem:[%s0 + $0x28] sm:$0xff]
  %v37 = vld [vmem:[%s0 + $0x30] sm:$0xff]
  %v38 = vld [vmem:[%s0 + $0x38] sm:$0xff]
  %v39 = vld [vmem:[%s2] sm:$0xff]
  %v40 = vld [vmem:[%s2 + $0x8] sm:$0xff]
  %v41 = vld [vmem:[%s2 + $0x10] sm:$0xff]
  %v42 = vld [vmem:[%s2 + $0x18] sm:$0xff]
  %v43 = vld [vmem:[%s4] sm:$0x1]
  %v45 = vperm.slane %v43, 0
  %vm47 = vcmask 261120
  %v49 = vsel %vm47, %v31, 0
  %v52 = vsel %vm47, %v32, 0
  %v55 = vsel %vm47, %v33, 0
  %v58 = vsel %vm47, %v34, 0
  %v61 = vsel %vm47, %v35, 0
  %v64 = vsel %vm47, %v36, 0
  %v67 = vsel %vm47, %v37, 0
  %v70 = vsel %vm47, %v38, 0
  %72 = vmatpush.msra.mxu0 0.0
  %73 = vmatpush.msra.mxu0 0.0
  %74 = vmatpush.msra.mxu0 0.0
  %75 = vmatpush.msra.mxu0 0.0
  %76 = vmatpush.msra.mxu0 0.0
  %77 = vmatpush.msra.mxu0 0.0
  %78 = vmatpush.msra.mxu0 0.0
  %79 = vmatpush.msra.mxu0 0.0
  %80 = vmatpush.msra.mxu0 0.0
  %81 = vmatpush.msra.mxu0 0.0
  %82 = vmatpush.msra.mxu0 0.0
  %83 = vmatpush.msra.mxu0 0.0
  %84 = vmatpush.msra.mxu0 %v42
  %85 = vmatpush.msra.mxu0 %v41
  %86 = vmatpush.msra.mxu0 %v40
  %87 = vmatpush.msra.mxu0 %v39
  %88 = vmatmul.f32.gmra.mxu0 %v49
  %v89 = vpop.f32.mrf.mxu0
  %v90 = vadd.f32 %v45, %v89
  %91 = vmatmul.f32.gmra.mxu0 %v52
  %v92 = vpop.f32.mrf.mxu0
  %v93 = vadd.f32 %v45, %v92
  %94 = vmatmul.f32.gmra.mxu0 %v55
  %v95 = vpop.f32.mrf.mxu0
  %v96 = vadd.f32 %v45, %v95
  %97 = vmatmul.f32.gmra.mxu0 %v58
  %v98 = vpop.f32.mrf.mxu0
  %v99 = vadd.f32 %v45, %v98
  %100 = vmatmul.f32.gmra.mxu0 %v61
  %v101 = vpop.f32.mrf.mxu0
  %v102 = vadd.f32 %v45, %v101
  %103 = vmatmul.f32.gmra.mxu0 %v64
  %v104 = vpop.f32.mrf.mxu0
  %v105 = vadd.f32 %v45, %v104
  %106 = vmatmul.f32.gmra.mxu0 %v67
  %v107 = vpop.f32.mrf.mxu0
  %v108 = vadd.f32 %v45, %v107
  %109 = vmatmul.f32.gmra.mxu0 %v70
  %v110 = vpop.f32.mrf.mxu0
  %v111 = vadd.f32 %v45, %v110
  %112 = vdwg.mxu0
  %v113 = vld [vmem:[%s3] sm:$0xff]
  %v114 = vld [vmem:[%s3 + $0x8] sm:$0xff]
  %v115 = vld [vmem:[%s3 + $0x10] sm:$0xff]
  %v116 = vld [vmem:[%s3 + $0x18] sm:$0xff]
  %v118 = vsel %vm47, 0.0, 0
  %120 = vmatpush.msra.mxu0 0.0
  %121 = vmatpush.msra.mxu0 0.0
  %122 = vmatpush.msra.mxu0 0.0
  %123 = vmatpush.msra.mxu0 0.0
  %124 = vmatpush.msra.mxu0 0.0
  %125 = vmatpush.msra.mxu0 0.0
  %126 = vmatpush.msra.mxu0 0.0
  %127 = vmatpush.msra.mxu0 0.0
  %128 = vmatpush.msra.mxu0 0.0
  %129 = vmatpush.msra.mxu0 0.0
  %130 = vmatpush.msra.mxu0 0.0
  %131 = vmatpush.msra.mxu0 0.0
  %132 = vmatpush.msra.mxu0 %v116
  %133 = vmatpush.msra.mxu0 %v115
  %134 = vmatpush.msra.mxu0 %v114
  %135 = vmatpush.msra.mxu0 %v113
  %136 = vmatmul.f32.gmra.mxu0 %v118
  %v137 = vpop.f32.mrf.mxu0
  %v138 = vadd.f32 0.0, %v137
  %139 = vdwg.mxu0
  %v140 = vadd.f32 %v90, %v138
  %v141 = vmul.f32 %v140, 0.5
  %v142 = vtanh.pop %v141
  %v143 = vadd.f32 %v142, 1.0
  %v144 = vmul.f32 %v143, 0.5
  %v145 = vtanh.pop %v140
  %v146 = vmul.f32 %v144, 0.0
  %148 = vrot.lane.b32.xlu0 %v145, 64
  %v149 = vpop.permute.xlu0 %148
  %v151 = vmul.f32 %v144, %v149
  %153 = vrot.lane.b32.xlu0 %v151, 32
  %v154 = vpop.permute.xlu0 %153
  %v156 = vadd.f32 %v146, %v154
  %v157 = vtanh.pop %v156
  %159 = vrot.lane.b32.xlu0 %v157, 64
  %v160 = vpop.permute.xlu0 %159
  %v162 = vmul.f32 %v144, %v160
  %164 = vrot.lane.b32.xlu0 %v162, 32
  %v165 = vpop.permute.xlu0 %164
  %v166 = vsel %vm47, %v165, 0
  %168 = vmatpush.msra.mxu0 0.0
  %169 = vmatpush.msra.mxu0 0.0
  %170 = vmatpush.msra.mxu0 0.0
  %171 = vmatpush.msra.mxu0 0.0
  %172 = vmatpush.msra.mxu0 0.0
  %173 = vmatpush.msra.mxu0 0.0
  %174 = vmatpush.msra.mxu0 0.0
  %175 = vmatpush.msra.mxu0 0.0
  %176 = vmatpush.msra.mxu0 0.0
  %177 = vmatpush.msra.mxu0 0.0
  %178 = vmatpush.msra.mxu0 0.0
  %179 = vmatpush.msra.mxu0 0.0
  %180 = vmatpush.msra.mxu0 %v116
  %181 = vmatpush.msra.mxu0 %v115
  %182 = vmatpush.msra.mxu0 %v114
  %183 = vmatpush.msra.mxu0 %v113
  %184 = vmatmul.f32.gmra.mxu0 %v166
  %v185 = vpop.f32.mrf.mxu0
  %v186 = vadd.f32 0.0, %v185
  %187 = vdwg.mxu0
  %v188 = vadd.f32 %v93, %v186
  %v189 = vmul.f32 %v188, 0.5
  %v190 = vtanh.pop %v189
  %v191 = vadd.f32 %v190, 1.0
  %v192 = vmul.f32 %v191, 0.5
  %v193 = vtanh.pop %v188
  %v194 = vmul.f32 %v192, %v156
  %196 = vrot.lane.b32.xlu0 %v193, 64
  %v197 = vpop.permute.xlu0 %196
  %v199 = vmul.f32 %v192, %v197
  %201 = vrot.lane.b32.xlu0 %v199, 32
  %v202 = vpop.permute.xlu0 %201
  %v204 = vadd.f32 %v194, %v202
  %v205 = vtanh.pop %v204
  %207 = vrot.lane.b32.xlu0 %v205, 64
  %v208 = vpop.permute.xlu0 %207
  %v210 = vmul.f32 %v192, %v208
  %212 = vrot.lane.b32.xlu0 %v210, 32
  %v213 = vpop.permute.xlu0 %212
  %v214 = vsel %vm47, %v213, 0
  %216 = vmatpush.msra.mxu0 0.0
  %217 = vmatpush.msra.mxu0 0.0
  %218 = vmatpush.msra.mxu0 0.0
  %219 = vmatpush.msra.mxu0 0.0
  %220 = vmatpush.msra.mxu0 0.0
  %221 = vmatpush.msra.mxu0 0.0
  %222 = vmatpush.msra.mxu0 0.0
  %223 = vmatpush.msra.mxu0 0.0
  %224 = vmatpush.msra.mxu0 0.0
  %225 = vmatpush.msra.mxu0 0.0
  %226 = vmatpush.msra.mxu0 0.0
  %227 = vmatpush.msra.mxu0 0.0
  %228 = vmatpush.msra.mxu0 %v116
  %229 = vmatpush.msra.mxu0 %v115
  %230 = vmatpush.msra.mxu0 %v114
  %231 = vmatpush.msra.mxu0 %v113
  %232 = vmatmul.f32.gmra.mxu0 %v214
  %v233 = vpop.f32.mrf.mxu0
  %v234 = vadd.f32 0.0, %v233
  %235 = vdwg.mxu0
  %v236 = vadd.f32 %v96, %v234
  %v237 = vmul.f32 %v236, 0.5
  %v238 = vtanh.pop %v237
  %v239 = vadd.f32 %v238, 1.0
  %v240 = vmul.f32 %v239, 0.5
  %v241 = vtanh.pop %v236
  %v242 = vmul.f32 %v240, %v204
  %244 = vrot.lane.b32.xlu0 %v241, 64
  %v245 = vpop.permute.xlu0 %244
  %v247 = vmul.f32 %v240, %v245
  %249 = vrot.lane.b32.xlu0 %v247, 32
  %v250 = vpop.permute.xlu0 %249
  %v252 = vadd.f32 %v242, %v250
  %v253 = vtanh.pop %v252
  %255 = vrot.lane.b32.xlu0 %v253, 64
  %v256 = vpop.permute.xlu0 %255
  %v258 = vmul.f32 %v240, %v256
  %260 = vrot.lane.b32.xlu0 %v258, 32
  %v261 = vpop.permute.xlu0 %260
  %v262 = vsel %vm47, %v261, 0
  %264 = vmatpush.msra.mxu0 0.0
  %265 = vmatpush.msra.mxu0 0.0
  %266 = vmatpush.msra.mxu0 0.0
  %267 = vmatpush.msra.mxu0 0.0
  %268 = vmatpush.msra.mxu0 0.0
  %269 = vmatpush.msra.mxu0 0.0
  %270 = vmatpush.msra.mxu0 0.0
  %271 = vmatpush.msra.mxu0 0.0
  %272 = vmatpush.msra.mxu0 0.0
  %273 = vmatpush.msra.mxu0 0.0
  %274 = vmatpush.msra.mxu0 0.0
  %275 = vmatpush.msra.mxu0 0.0
  %276 = vmatpush.msra.mxu0 %v116
  %277 = vmatpush.msra.mxu0 %v115
  %278 = vmatpush.msra.mxu0 %v114
  %279 = vmatpush.msra.mxu0 %v113
  %280 = vmatmul.f32.gmra.mxu0 %v262
  %v281 = vpop.f32.mrf.mxu0
  %v282 = vadd.f32 0.0, %v281
  %283 = vdwg.mxu0
  %v284 = vadd.f32 %v99, %v282
  %v285 = vmul.f32 %v284, 0.5
  %v286 = vtanh.pop %v285
  %v287 = vadd.f32 %v286, 1.0
  %v288 = vmul.f32 %v287, 0.5
  %v289 = vtanh.pop %v284
  %v290 = vmul.f32 %v288, %v252
  %292 = vrot.lane.b32.xlu0 %v289, 64
  %v293 = vpop.permute.xlu0 %292
  %v295 = vmul.f32 %v288, %v293
  %297 = vrot.lane.b32.xlu0 %v295, 32
  %v298 = vpop.permute.xlu0 %297
  %v300 = vadd.f32 %v290, %v298
  %v301 = vtanh.pop %v300
  %303 = vrot.lane.b32.xlu0 %v301, 64
  %v304 = vpop.permute.xlu0 %303
  %v306 = vmul.f32 %v288, %v304
  %308 = vrot.lane.b32.xlu0 %v306, 32
  %v309 = vpop.permute.xlu0 %308
  %v310 = vsel %vm47, %v309, 0
  %312 = vmatpush.msra.mxu0 0.0
  %313 = vmatpush.msra.mxu0 0.0
  %314 = vmatpush.msra.mxu0 0.0
  %315 = vmatpush.msra.mxu0 0.0
  %316 = vmatpush.msra.mxu0 0.0
  %317 = vmatpush.msra.mxu0 0.0
  %318 = vmatpush.msra.mxu0 0.0
  %319 = vmatpush.msra.mxu0 0.0
  %320 = vmatpush.msra.mxu0 0.0
  %321 = vmatpush.msra.mxu0 0.0
  %322 = vmatpush.msra.mxu0 0.0
  %323 = vmatpush.msra.mxu0 0.0
  %324 = vmatpush.msra.mxu0 %v116
  %325 = vmatpush.msra.mxu0 %v115
  %326 = vmatpush.msra.mxu0 %v114
  %327 = vmatpush.msra.mxu0 %v113
  %328 = vmatmul.f32.gmra.mxu0 %v310
  %v329 = vpop.f32.mrf.mxu0
  %v330 = vadd.f32 0.0, %v329
  %331 = vdwg.mxu0
  %v332 = vadd.f32 %v102, %v330
  %v333 = vmul.f32 %v332, 0.5
  %v334 = vtanh.pop %v333
  %v335 = vadd.f32 %v334, 1.0
  %v336 = vmul.f32 %v335, 0.5
  %v337 = vtanh.pop %v332
  %v338 = vmul.f32 %v336, %v300
  %340 = vrot.lane.b32.xlu0 %v337, 64
  %v341 = vpop.permute.xlu0 %340
  %v343 = vmul.f32 %v336, %v341
  %345 = vrot.lane.b32.xlu0 %v343, 32
  %v346 = vpop.permute.xlu0 %345
  %v348 = vadd.f32 %v338, %v346
  %v349 = vtanh.pop %v348
  %351 = vrot.lane.b32.xlu0 %v349, 64
  %v352 = vpop.permute.xlu0 %351
  %v354 = vmul.f32 %v336, %v352
  %356 = vrot.lane.b32.xlu0 %v354, 32
  %v357 = vpop.permute.xlu0 %356
  %v358 = vsel %vm47, %v357, 0
  %360 = vmatpush.msra.mxu0 0.0
  %361 = vmatpush.msra.mxu0 0.0
  %362 = vmatpush.msra.mxu0 0.0
  %363 = vmatpush.msra.mxu0 0.0
  %364 = vmatpush.msra.mxu0 0.0
  %365 = vmatpush.msra.mxu0 0.0
  %366 = vmatpush.msra.mxu0 0.0
  %367 = vmatpush.msra.mxu0 0.0
  %368 = vmatpush.msra.mxu0 0.0
  %369 = vmatpush.msra.mxu0 0.0
  %370 = vmatpush.msra.mxu0 0.0
  %371 = vmatpush.msra.mxu0 0.0
  %372 = vmatpush.msra.mxu0 %v116
  %373 = vmatpush.msra.mxu0 %v115
  %374 = vmatpush.msra.mxu0 %v114
  %375 = vmatpush.msra.mxu0 %v113
  %376 = vmatmul.f32.gmra.mxu0 %v358
  %v377 = vpop.f32.mrf.mxu0
  %v378 = vadd.f32 0.0, %v377
  %379 = vdwg.mxu0
  %v380 = vadd.f32 %v105, %v378
  %v381 = vmul.f32 %v380, 0.5
  %v382 = vtanh.pop %v381
  %v383 = vadd.f32 %v382, 1.0
  %v384 = vmul.f32 %v383, 0.5
  %v385 = vtanh.pop %v380
  %v386 = vmul.f32 %v384, %v348
  %388 = vrot.lane.b32.xlu0 %v385, 64
  %v389 = vpop.permute.xlu0 %388
  %v391 = vmul.f32 %v384, %v389
  %393 = vrot.lane.b32.xlu0 %v391, 32
  %v394 = vpop.permute.xlu0 %393
  %v396 = vadd.f32 %v386, %v394
  %v397 = vtanh.pop %v396
  %399 = vrot.lane.b32.xlu0 %v397, 64
  %v400 = vpop.permute.xlu0 %399
  %v402 = vmul.f32 %v384, %v400
  %404 = vrot.lane.b32.xlu0 %v402, 32
  %v405 = vpop.permute.xlu0 %404
  %v406 = vsel %vm47, %v405, 0
  %408 = vmatpush.msra.mxu0 0.0
  %409 = vmatpush.msra.mxu0 0.0
  %410 = vmatpush.msra.mxu0 0.0
  %411 = vmatpush.msra.mxu0 0.0
  %412 = vmatpush.msra.mxu0 0.0
  %413 = vmatpush.msra.mxu0 0.0
  %414 = vmatpush.msra.mxu0 0.0
  %415 = vmatpush.msra.mxu0 0.0
  %416 = vmatpush.msra.mxu0 0.0
  %417 = vmatpush.msra.mxu0 0.0
  %418 = vmatpush.msra.mxu0 0.0
  %419 = vmatpush.msra.mxu0 0.0
  %420 = vmatpush.msra.mxu0 %v116
  %421 = vmatpush.msra.mxu0 %v115
  %422 = vmatpush.msra.mxu0 %v114
  %423 = vmatpush.msra.mxu0 %v113
  %424 = vmatmul.f32.gmra.mxu0 %v406
  %v425 = vpop.f32.mrf.mxu0
  %v426 = vadd.f32 0.0, %v425
  %427 = vdwg.mxu0
  %v428 = vadd.f32 %v108, %v426
  %v429 = vmul.f32 %v428, 0.5
  %v430 = vtanh.pop %v429
  %v431 = vadd.f32 %v430, 1.0
  %v432 = vmul.f32 %v431, 0.5
  %v433 = vtanh.pop %v428
  %v434 = vmul.f32 %v432, %v396
  %436 = vrot.lane.b32.xlu0 %v433, 64
  %v437 = vpop.permute.xlu0 %436
  %v439 = vmul.f32 %v432, %v437
  %441 = vrot.lane.b32.xlu0 %v439, 32
  %v442 = vpop.permute.xlu0 %441
  %v444 = vadd.f32 %v434, %v442
  %v445 = vtanh.pop %v444
  %447 = vrot.lane.b32.xlu0 %v445, 64
  %v448 = vpop.permute.xlu0 %447
  %v450 = vmul.f32 %v432, %v448
  %452 = vrot.lane.b32.xlu0 %v450, 32
  %v453 = vpop.permute.xlu0 %452
  %v454 = vsel %vm47, %v453, 0
  %456 = vmatpush.msra.mxu0 0.0
  %457 = vmatpush.msra.mxu0 0.0
  %458 = vmatpush.msra.mxu0 0.0
  %459 = vmatpush.msra.mxu0 0.0
  %460 = vmatpush.msra.mxu0 0.0
  %461 = vmatpush.msra.mxu0 0.0
  %462 = vmatpush.msra.mxu0 0.0
  %463 = vmatpush.msra.mxu0 0.0
  %464 = vmatpush.msra.mxu0 0.0
  %465 = vmatpush.msra.mxu0 0.0
  %466 = vmatpush.msra.mxu0 0.0
  %467 = vmatpush.msra.mxu0 0.0
  %468 = vmatpush.msra.mxu0 %v116
  %469 = vmatpush.msra.mxu0 %v115
  %470 = vmatpush.msra.mxu0 %v114
  %471 = vmatpush.msra.mxu0 %v113
  %472 = vmatmul.f32.gmra.mxu0 %v454
  %v473 = vpop.f32.mrf.mxu0
  %v474 = vadd.f32 0.0, %v473
  %475 = vdwg.mxu0
  %v476 = vadd.f32 %v111, %v474
  %v477 = vmul.f32 %v476, 0.5
  %v478 = vtanh.pop %v477
  %v479 = vadd.f32 %v478, 1.0
  %v480 = vmul.f32 %v479, 0.5
  %v481 = vtanh.pop %v476
  %v482 = vmul.f32 %v480, %v444
  %484 = vrot.lane.b32.xlu0 %v481, 64
  %v485 = vpop.permute.xlu0 %484
  %v487 = vmul.f32 %v480, %v485
  %489 = vrot.lane.b32.xlu0 %v487, 32
  %v490 = vpop.permute.xlu0 %489
  %v492 = vadd.f32 %v482, %v490
  %v493 = vtanh.pop %v492
  %495 = vrot.lane.b32.xlu0 %v493, 64
  %v496 = vpop.permute.xlu0 %495
  %v498 = vmul.f32 %v480, %v496
  %v499 = vld [vmem:[%s1] sm:$0xff]
  %v500 = vld [vmem:[%s1 + $0x8] sm:$0xff]
  %v501 = vld [vmem:[%s1 + $0x10] sm:$0xff]
  %v502 = vld [vmem:[%s1 + $0x18] sm:$0xff]
  %v503 = vld [vmem:[%s1 + $0x20] sm:$0xff]
  %v504 = vld [vmem:[%s1 + $0x28] sm:$0xff]
  %v505 = vld [vmem:[%s5] sm:$0x1]
  %v507 = vperm.slane %v505, 0
  %508 = vrot.lane.b32.xlu0 %v507, 96
  %v509 = vpop.permute.xlu0 %508
  %v511 = vmul.f32 %v498, %v509
  %513 = vrot.lane.b32.xlu0 %v511, 32
  %v514 = vpop.permute.xlu0 %513
  %v516 = vsel %vm47, %v514, 0.0
  %517 = vadd.xlane.f32.xlu0 %v516
  %v518 = vpop.xlane.xlu0 %517
  %v519 = vld [vmem:[%s6] sm:$0x3f]
  %v521 = vperm.slane %v519, 0
  %v522 = vperm.slane %v519, 1
  %v523 = vperm.slane %v519, 2
  %v524 = vperm.slane %v519, 3
  %v525 = vperm.slane %v519, 4
  %v526 = vperm.slane %v519, 5
  %v533 = vmul.f32 %v499, %v521
  %v534 = vmul.f32 %v500, %v522
  %v535 = vmul.f32 %v501, %v523
  %v536 = vmul.f32 %v502, %v524
  %v537 = vmul.f32 %v503, %v525
  %v538 = vmul.f32 %v504, %v526
  %v539 = vadd.f32 %v533, %v534
  %v540 = vadd.f32 %v539, %v535
  %v541 = vadd.f32 %v540, %v536
  %v542 = vadd.f32 %v541, %v537
  %v543 = vadd.f32 %v542, %v538
  %544 = vadd.xlane.f32.xlu0 %v543
  %v545 = vpop.xlane.xlu0 %544
  %v546 = vadd.f32 %v518, %v545
  %v547 = vld [vmem:[#allocation2] sm:$0x1]
  %v549 = vperm.slane %v547, 0
  %v551 = vadd.f32 %v546, %v549
  %vm552 = vcmask 7168
  %553 = vst.msk [vmem:[%s8] sm:$0xff] %vm552, %v551
  // Predicated region
  $region34: #{_lambda_.1} parent=0 // pred_check
    _
  $region35: #{_lambda_.1} parent=0 // pred_check_branch
    %555 = sbr.rel (0) target = $region37
  $region36: #{_lambda_.1} parent=0 // pred_region
    _
  $region37: #{_lambda_.1} parent=0 // pred_fallthru
    _
  // Predicated region
  $region38: #{_lambda_.1} parent=0 // pred_check
    _
  $region39: #{_lambda_.1} parent=0 // pred_check_branch
    %557 = sbr.rel (0) target = $region41
  $region40: #{_lambda_.1} parent=0 // pred_region
    _
  $region41: #{_lambda_.1} parent=0 // pred_fallthru
    _

</llo_original>
